<compile_context>
chip_gen: v5e
topology: v5e:2x2
jax: 0.10.0
libtpu: 0.0.40
codegen_flags: <defaults>
</compile_context>

<pallas_src>
import jax
import jax.numpy as jnp
from jax.experimental import pallas as pl
from jax.experimental.pallas import tpu as pltpu


# ----------------------------- kernel ---------------------------------------
def actor_kernel(x_ref, w1_ref, w2_ref, w3_ref, w4_ref, vec_ref, mu_ref):
    F2 = w1_ref.shape[1]          # 2 * feature_dim   (v-half | i-half)
    H2 = w2_ref.shape[1]          # 2 * hidden_dim
    N_out = w4_ref.shape[1]       # lane-padded output width (>= 128)
    Fh = F2 // 2                  # per-branch feature dim

    x = x_ref[...]
    vec = vec_ref[...]
    b1 = vec[0:1, :F2]
    gamma = vec[1:2, :F2]
    beta = vec[2:3, :F2]
    b2 = vec[3:4, :H2]
    b3 = vec[4:5, :H2]
    b4 = vec[5:6, :N_out]

    # trunk: block-diag Linear -> per-branch LayerNorm -> Tanh
    h = jnp.dot(x, w1_ref[...], preferred_element_type=jnp.float32) + b1

    col = jax.lax.broadcasted_iota(jnp.int32, h.shape, 1)
    is_v = col < Fh
    inv_n = 1.0 / Fh
    mean_v = jnp.sum(jnp.where(is_v, h, 0.0), axis=-1, keepdims=True) * inv_n
    mean_i = jnp.sum(jnp.where(is_v, 0.0, h), axis=-1, keepdims=True) * inv_n
    mean = jnp.where(is_v, mean_v, mean_i)
    c = h - mean
    c2 = c * c
    var_v = jnp.sum(jnp.where(is_v, c2, 0.0), axis=-1, keepdims=True) * inv_n
    var_i = jnp.sum(jnp.where(is_v, 0.0, c2), axis=-1, keepdims=True) * inv_n
    var = jnp.where(is_v, var_v, var_i)
    h = c * jax.lax.rsqrt(var + 1e-5)          # eps matches nn.LayerNorm
    h = jnp.tanh(h * gamma + beta)

    # policy: block-diag Linear -> ReLU -> Linear -> ReLU -> merged Linear
    h = jnp.maximum(jnp.dot(h, w2_ref[...], preferred_element_type=jnp.float32) + b2, 0.0)
    h = jnp.maximum(jnp.dot(h, w3_ref[...], preferred_element_type=jnp.float32) + b3, 0.0)
    # W4 rows are stacked (v on top of i) onto the SAME output columns, so this
    # matmul already computes  v_actor(obs) + i_actor(phy).
    out = jnp.dot(h, w4_ref[...], preferred_element_type=jnp.float32) + b4
    mu_ref[...] = jnp.tanh(out)                # full-width, unmasked store


# ----------------------------- packing ---------------------------------------
def _round_up(x, m):
    return ((x + m - 1) // m) * m


def pack_actor_params(v_params, i_params):
    """Offline packing of the two piegActor branches into 5 block-diag arrays."""
    vw1, vb1, vg, vbe, vw2, vb2, vw3, vb3, vw4, vb4 = v_params
    iw1, ib1, ig, ibe, iw2, ib2, iw3, ib3, iw4, ib4 = i_params

    Kv, F = vw1.shape
    Ki, _ = iw1.shape
    H = vw2.shape[1]
    A = vw4.shape[1]
    K_pad = _round_up(Kv + Ki, 8)          # sublane-aligned contraction dim
    F2, H2 = 2 * F, 2 * H
    N_out = _round_up(A, 128)              # lane-dense output slab

    def blockdiag(a, b, rows, cols):
        m = jnp.zeros((rows, cols), jnp.float32)
        m = m.at[:a.shape[0], :a.shape[1]].set(a)
        m = m.at[a.shape[0]:a.shape[0] + b.shape[0],
                 a.shape[1]:a.shape[1] + b.shape[1]].set(b)
        return m

    w1 = blockdiag(vw1, iw1, K_pad, F2)
    w2 = blockdiag(vw2, iw2, F2, H2)
    w3 = blockdiag(vw3, iw3, H2, H2)
    w4 = jnp.zeros((H2, N_out), jnp.float32)
    w4 = w4.at[:H, :A].set(vw4)
    w4 = w4.at[H:H2, :A].set(iw4)          # same output cols -> branch sum

    # all small row-vectors packed into a single (8, W) array
    W_vec = max(F2, H2, N_out)
    vec = jnp.zeros((8, W_vec), jnp.float32)
    vec = vec.at[0, :F2].set(jnp.concatenate([vb1.reshape(-1), ib1.reshape(-1)]))
    vec = vec.at[1, :F2].set(jnp.concatenate([vg.reshape(-1), ig.reshape(-1)]))
    vec = vec.at[2, :F2].set(jnp.concatenate([vbe.reshape(-1), ibe.reshape(-1)]))
    vec = vec.at[3, :H2].set(jnp.concatenate([vb2.reshape(-1), ib2.reshape(-1)]))
    vec = vec.at[4, :H2].set(jnp.concatenate([vb3.reshape(-1), ib3.reshape(-1)]))
    vec = vec.at[5, :A].set(vb4.reshape(-1) + ib4.reshape(-1))

    meta = dict(Kv=Kv, Ki=Ki, K_pad=K_pad, action_dim=A)
    return (w1, w2, w3, w4, vec), meta


# ----------------------------- wrapper ---------------------------------------
def actor_forward(obs, phy, std, packed, meta):
    w1, w2, w3, w4, vec = packed
    B = obs.shape[0]
    A = meta["action_dim"]
    Kv, Ki, K_pad = meta["Kv"], meta["Ki"], meta["K_pad"]
    B_pad = _round_up(B, 8)
    N_out = w4.shape[1]

    x = jnp.zeros((B_pad, K_pad), jnp.float32)
    x = x.at[:B, :Kv].set(obs)
    x = x.at[:B, Kv:Kv + Ki].set(phy)

    mu_padded = pl.pallas_call(
        actor_kernel,
        out_shape=jax.ShapeDtypeStruct((B_pad, N_out), jnp.float32),
        in_specs=[pl.BlockSpec(memory_space=pltpu.MemorySpace.VMEM)] * 6,
        out_specs=pl.BlockSpec(memory_space=pltpu.MemorySpace.VMEM),
    )(x, w1, w2, w3, w4, vec)

    mu = mu_padded[:B, :A]
    std_out = jnp.full((B, A), std, dtype=jnp.float32)   # constant broadcast in XLA
    return mu, std_out


# ----------------------------- init / reference -------------------------------
def _init_pieg_params(key, repr_dim, feature_dim, hidden_dim, action_dim):
    """Deterministic parameter init; linear weights stored as (in, out)."""
    ks = jax.random.split(key, 4)

    def lin(k, n_in, n_out):
        scale = 1.0 / jnp.sqrt(n_in)
        w = jax.random.uniform(k, (n_in, n_out), jnp.float32, -scale, scale)
        b = jnp.zeros((1, n_out), jnp.float32)
        return w, b

    w1, b1 = lin(ks[0], repr_dim, feature_dim)
    g = jnp.ones((1, feature_dim), jnp.float32)      # LayerNorm gamma
    be = jnp.zeros((1, feature_dim), jnp.float32)    # LayerNorm beta
    w2, b2 = lin(ks[1], feature_dim, hidden_dim)
    w3, b3 = lin(ks[2], hidden_dim, hidden_dim)
    w4, b4 = lin(ks[3], hidden_dim, action_dim)
    return (w1, b1, g, be, w2, b2, w3, b3, w4, b4)


def _actor_forward_ref(obs, phy, std, v_params, i_params):
    def pieg(x, p):
        w1, b1, g, be, w2, b2, w3, b3, w4, b4 = p
        h = x @ w1 + b1
        m = h.mean(-1, keepdims=True)
        v = ((h - m) ** 2).mean(-1, keepdims=True)
        h = (h - m) / jnp.sqrt(v + 1e-5) * g + be
        h = jnp.tanh(h)
        h = jnp.maximum(h @ w2 + b2, 0.0)
        h = jnp.maximum(h @ w3 + b3, 0.0)
        return h @ w4 + b4

    temp = pieg(obs, v_params) + pieg(phy, i_params)
    return jnp.tanh(temp), jnp.ones_like(temp) * std


# ----------------------------- main -------------------------------------------
if __name__ == "__main__":
    # small shapes consistent with the module's forward
    B = 2
    vision_repr_dim = 32
    inner_state_repr_dim = 24
    feature_dim = 32
    hidden_dim = 32
    action_dim = 4          # action_shape = (4,)
    std = 0.1

    key = jax.random.PRNGKey(0)
    k_obs, k_phy, k_v, k_i = jax.random.split(key, 4)

    obs = jax.random.normal(k_obs, (B, vision_repr_dim), jnp.float32)
    phy = jax.random.normal(k_phy, (B, inner_state_repr_dim), jnp.float32)

    v_params = _init_pieg_params(k_v, vision_repr_dim, feature_dim, hidden_dim, action_dim)
    i_params = _init_pieg_params(k_i, inner_state_repr_dim, feature_dim, hidden_dim, action_dim)

    packed, meta = pack_actor_params(v_params, i_params)   # offline, once

    mu, std_out = actor_forward(obs, phy, std, packed, meta)
    jax.block_until_ready((mu, std_out))

    mu_ref, std_ref = _actor_forward_ref(obs, phy, std, v_params, i_params)
    assert jnp.allclose(mu, mu_ref, atol=1e-5, rtol=1e-5), "mu mismatch"
    assert jnp.allclose(std_out, std_ref, atol=1e-6), "std mismatch"

    print("KERNEL_OK")
</pallas_src>

<mosaic_0001>
module attributes {stable_mosaic.version = 11 : i64} {
  func.func @actor_kernel(%arg0: memref<8x56xf32, #tpu.memory_space<vmem>>, %arg1: memref<56x64xf32, #tpu.memory_space<vmem>>, %arg2: memref<64x64xf32, #tpu.memory_space<vmem>>, %arg3: memref<64x64xf32, #tpu.memory_space<vmem>>, %arg4: memref<64x128xf32, #tpu.memory_space<vmem>>, %arg5: memref<8x128xf32, #tpu.memory_space<vmem>>, %arg6: memref<8x128xf32, #tpu.memory_space<vmem>>) attributes {dimension_semantics = [], scalar_prefetch = 0 : i64, scratch_operands = 0 : i64, tpu.core_type = #tpu.core_type<tc>} {
    %c0 = arith.constant 0 : index
    %c0_0 = arith.constant 0 : index
    %0 = vector.load %arg0[%c0, %c0_0] : memref<8x56xf32, #tpu.memory_space<vmem>>, vector<8x56xf32>
    %c0_1 = arith.constant 0 : index
    %c0_2 = arith.constant 0 : index
    %1 = vector.load %arg5[%c0_1, %c0_2] : memref<8x128xf32, #tpu.memory_space<vmem>>, vector<8x128xf32>
    %2 = vector.extract_strided_slice %1 {offsets = [0, 0], sizes = [1, 64], strides = [1, 1]} : vector<8x128xf32> to vector<1x64xf32>
    %3 = vector.extract_strided_slice %1 {offsets = [1, 0], sizes = [1, 64], strides = [1, 1]} : vector<8x128xf32> to vector<1x64xf32>
    %4 = vector.extract_strided_slice %1 {offsets = [2, 0], sizes = [1, 64], strides = [1, 1]} : vector<8x128xf32> to vector<1x64xf32>
    %5 = vector.extract_strided_slice %1 {offsets = [3, 0], sizes = [1, 64], strides = [1, 1]} : vector<8x128xf32> to vector<1x64xf32>
    %6 = vector.extract_strided_slice %1 {offsets = [4, 0], sizes = [1, 64], strides = [1, 1]} : vector<8x128xf32> to vector<1x64xf32>
    %7 = vector.extract_strided_slice %1 {offsets = [5, 0], sizes = [1, 128], strides = [1, 1]} : vector<8x128xf32> to vector<1x128xf32>
    %c0_3 = arith.constant 0 : index
    %c0_4 = arith.constant 0 : index
    %8 = vector.load %arg1[%c0_3, %c0_4] : memref<56x64xf32, #tpu.memory_space<vmem>>, vector<56x64xf32>
    %cst = arith.constant dense<0.000000e+00> : vector<8x64xf32>
    %9 = tpu.matmul %0, %8, %cst {dimension_numbers = #tpu.dot_dimension_numbers<[1], [0], [0], [1], [0, 0, 1, 1], [], []>} : vector<8x56xf32>, vector<56x64xf32>, vector<8x64xf32> -> vector<8x64xf32>
    %10 = vector.broadcast %2 : vector<1x64xf32> to vector<8x64xf32>
    %11 = arith.addf %9, %10 : vector<8x64xf32>
    %12 = tpu.iota {dimensions = array<i32: 1>} : vector<8x64xi32>
    %c32_i32 = arith.constant 32 : i32
    %13 = vector.broadcast %c32_i32 : i32 to vector<8x64xi32>
    %14 = arith.cmpi slt, %12, %13 : vector<8x64xi32>
    %cst_5 = arith.constant 0.000000e+00 : f32
    %15 = vector.broadcast %cst_5 : f32 to vector<8x64xf32>
    %16 = arith.select %14, %11, %15 : vector<8x64xi1>, vector<8x64xf32>
    %cst_6 = arith.constant dense<0.000000e+00> : vector<8xf32>
    %17 = vector.multi_reduction <add>, %16, %cst_6 [1] : vector<8x64xf32> to vector<8xf32>
    %18 = vector.shape_cast %17 : vector<8xf32> to vector<8x1xf32>
    %cst_7 = arith.constant 3.125000e-02 : f32
    %19 = vector.broadcast %cst_7 : f32 to vector<8x1xf32>
    %20 = arith.mulf %18, %19 : vector<8x1xf32>
    %cst_8 = arith.constant 0.000000e+00 : f32
    %21 = vector.broadcast %cst_8 : f32 to vector<8x64xf32>
    %22 = arith.select %14, %21, %11 : vector<8x64xi1>, vector<8x64xf32>
    %cst_9 = arith.constant dense<0.000000e+00> : vector<8xf32>
    %23 = vector.multi_reduction <add>, %22, %cst_9 [1] : vector<8x64xf32> to vector<8xf32>
    %24 = vector.shape_cast %23 : vector<8xf32> to vector<8x1xf32>
    %cst_10 = arith.constant 3.125000e-02 : f32
    %25 = vector.broadcast %cst_10 : f32 to vector<8x1xf32>
    %26 = arith.mulf %24, %25 : vector<8x1xf32>
    %27 = vector.shape_cast %20 : vector<8x1xf32> to vector<8x1xf32>
    %28 = vector.broadcast %27 : vector<8x1xf32> to vector<8x64xf32>
    %29 = vector.shape_cast %26 : vector<8x1xf32> to vector<8x1xf32>
    %30 = vector.broadcast %29 : vector<8x1xf32> to vector<8x64xf32>
    %31 = arith.select %14, %28, %30 : vector<8x64xi1>, vector<8x64xf32>
    %32 = arith.subf %11, %31 : vector<8x64xf32>
    %33 = arith.mulf %32, %32 : vector<8x64xf32>
    %cst_11 = arith.constant 0.000000e+00 : f32
    %34 = vector.broadcast %cst_11 : f32 to vector<8x64xf32>
    %35 = arith.select %14, %33, %34 : vector<8x64xi1>, vector<8x64xf32>
    %cst_12 = arith.constant dense<0.000000e+00> : vector<8xf32>
    %36 = vector.multi_reduction <add>, %35, %cst_12 [1] : vector<8x64xf32> to vector<8xf32>
    %37 = vector.shape_cast %36 : vector<8xf32> to vector<8x1xf32>
    %cst_13 = arith.constant 3.125000e-02 : f32
    %38 = vector.broadcast %cst_13 : f32 to vector<8x1xf32>
    %39 = arith.mulf %37, %38 : vector<8x1xf32>
    %cst_14 = arith.constant 0.000000e+00 : f32
    %40 = vector.broadcast %cst_14 : f32 to vector<8x64xf32>
    %41 = arith.select %14, %40, %33 : vector<8x64xi1>, vector<8x64xf32>
    %cst_15 = arith.constant dense<0.000000e+00> : vector<8xf32>
    %42 = vector.multi_reduction <add>, %41, %cst_15 [1] : vector<8x64xf32> to vector<8xf32>
    %43 = vector.shape_cast %42 : vector<8xf32> to vector<8x1xf32>
    %cst_16 = arith.constant 3.125000e-02 : f32
    %44 = vector.broadcast %cst_16 : f32 to vector<8x1xf32>
    %45 = arith.mulf %43, %44 : vector<8x1xf32>
    %46 = vector.shape_cast %39 : vector<8x1xf32> to vector<8x1xf32>
    %47 = vector.broadcast %46 : vector<8x1xf32> to vector<8x64xf32>
    %48 = vector.shape_cast %45 : vector<8x1xf32> to vector<8x1xf32>
    %49 = vector.broadcast %48 : vector<8x1xf32> to vector<8x64xf32>
    %50 = arith.select %14, %47, %49 : vector<8x64xi1>, vector<8x64xf32>
    %cst_17 = arith.constant 9.99999974E-6 : f32
    %51 = vector.broadcast %cst_17 : f32 to vector<8x64xf32>
    %52 = arith.addf %50, %51 : vector<8x64xf32>
    %53 = math.rsqrt %52 : vector<8x64xf32>
    %54 = arith.mulf %32, %53 : vector<8x64xf32>
    %55 = vector.broadcast %3 : vector<1x64xf32> to vector<8x64xf32>
    %56 = arith.mulf %54, %55 : vector<8x64xf32>
    %57 = vector.broadcast %4 : vector<1x64xf32> to vector<8x64xf32>
    %58 = arith.addf %56, %57 : vector<8x64xf32>
    %59 = math.tanh %58 : vector<8x64xf32>
    %c0_18 = arith.constant 0 : index
    %c0_19 = arith.constant 0 : index
    %60 = vector.load %arg2[%c0_18, %c0_19] : memref<64x64xf32, #tpu.memory_space<vmem>>, vector<64x64xf32>
    %cst_20 = arith.constant dense<0.000000e+00> : vector<8x64xf32>
    %61 = tpu.matmul %59, %60, %cst_20 {dimension_numbers = #tpu.dot_dimension_numbers<[1], [0], [0], [1], [0, 0, 1, 1], [], []>} : vector<8x64xf32>, vector<64x64xf32>, vector<8x64xf32> -> vector<8x64xf32>
    %62 = vector.broadcast %5 : vector<1x64xf32> to vector<8x64xf32>
    %63 = arith.addf %61, %62 : vector<8x64xf32>
    %cst_21 = arith.constant 0.000000e+00 : f32
    %64 = vector.broadcast %cst_21 : f32 to vector<8x64xf32>
    %65 = arith.maximumf %63, %64 : vector<8x64xf32>
    %c0_22 = arith.constant 0 : index
    %c0_23 = arith.constant 0 : index
    %66 = vector.load %arg3[%c0_22, %c0_23] : memref<64x64xf32, #tpu.memory_space<vmem>>, vector<64x64xf32>
    %cst_24 = arith.constant dense<0.000000e+00> : vector<8x64xf32>
    %67 = tpu.matmul %65, %66, %cst_24 {dimension_numbers = #tpu.dot_dimension_numbers<[1], [0], [0], [1], [0, 0, 1, 1], [], []>} : vector<8x64xf32>, vector<64x64xf32>, vector<8x64xf32> -> vector<8x64xf32>
    %68 = vector.broadcast %6 : vector<1x64xf32> to vector<8x64xf32>
    %69 = arith.addf %67, %68 : vector<8x64xf32>
    %cst_25 = arith.constant 0.000000e+00 : f32
    %70 = vector.broadcast %cst_25 : f32 to vector<8x64xf32>
    %71 = arith.maximumf %69, %70 : vector<8x64xf32>
    %c0_26 = arith.constant 0 : index
    %c0_27 = arith.constant 0 : index
    %72 = vector.load %arg4[%c0_26, %c0_27] : memref<64x128xf32, #tpu.memory_space<vmem>>, vector<64x128xf32>
    %cst_28 = arith.constant dense<0.000000e+00> : vector<8x128xf32>
    %73 = tpu.matmul %71, %72, %cst_28 {dimension_numbers = #tpu.dot_dimension_numbers<[1], [0], [0], [1], [0, 0, 1, 1], [], []>} : vector<8x64xf32>, vector<64x128xf32>, vector<8x128xf32> -> vector<8x128xf32>
    %74 = vector.broadcast %7 : vector<1x128xf32> to vector<8x128xf32>
    %75 = arith.addf %73, %74 : vector<8x128xf32>
    %76 = math.tanh %75 : vector<8x128xf32>
    %c0_29 = arith.constant 0 : index
    %c0_30 = arith.constant 0 : index
    %77 = vector.load %arg6[%c0_29, %c0_30] : memref<8x128xf32, #tpu.memory_space<vmem>>, vector<8x128xf32>
    tpu.vector_store %arg6[%c0_29, %c0_30], %76 {strides = array<i32>} : memref<8x128xf32, #tpu.memory_space<vmem>>, vector<8x128xf32>,
    return
  }
}

</mosaic_0001>

<llo_original>
// kernel: tpu_custom_call.1
$region0: #{tpu_custom_call.1}
  #allocation0 [shape = 'u32[]', space=smem, size = 0x4, offset = 0x4, fixed_abs, tag = 'smem constant byte address 0x4 - core index']
  #allocation1 [shape = 'u32[72,128]{1,0:T(1,128)}', space=vmem, size = 0x9000, scoped, tag = 'internal scratch']
  %s0 = inlined_call_operand.hbm [shape: f32[8,56], index: 0, kind: input, shape index: {}]
  %s1 = inlined_call_operand.hbm [shape: f32[56,64], index: 1, kind: input, shape index: {}]
  %s2 = inlined_call_operand.hbm [shape: f32[64,64], index: 2, kind: input, shape index: {}]
  %s3 = inlined_call_operand.hbm [shape: f32[64,64], index: 3, kind: input, shape index: {}]
  %s4 = inlined_call_operand.hbm [shape: f32[64,128], index: 4, kind: input, shape index: {}]
  %s5 = inlined_call_operand.hbm [shape: f32[8,128], index: 5, kind: input, shape index: {}]
  %s6 = inlined_call_operand.hbm [shape: f32[8,128], index: 6, kind: output, shape index: {}]
  %s7 = sld [smem:[#allocation0]]
  $region58: #{tpu_custom_call.1} parent=0
    _
  %s9 = ssub.s32 1, %s7
  %s10 = scalar_select 0, %s9, %s7
  $region1: #{tpu_custom_call.1} parent=0
    #allocation2 [shape = 'u8[4096]{0}', space=vmem, size = 0x1000, scoped, tag = 'input window, operand 0, single buffered']
    #allocation3 [shape = 's32[1]{0}', space=sflag, size = 0x4, scoped, tag = 'scoped memory for tpu_custom_call.1']
    #allocation4 [shape = 's32[1]{0}', space=sflag, size = 0x4, scoped, tag = 'scoped memory for tpu_custom_call.1']
    #allocation5 [shape = 'u8[28672]{0}', space=vmem, size = 0x7000, scoped, tag = 'input window, operand 1, single buffered']
    #allocation6 [shape = 's32[1]{0}', space=sflag, size = 0x4, scoped, tag = 'scoped memory for tpu_custom_call.1']
    #allocation7 [shape = 'u8[32768]{0}', space=vmem, size = 0x8000, scoped, tag = 'input window, operand 2, single buffered']
    #allocation8 [shape = 'u8[32768]{0}', space=vmem, size = 0x8000, scoped, tag = 'input window, operand 3, single buffered']
    #allocation9 [shape = 's32[1]{0}', space=sflag, size = 0x4, scoped, tag = 'scoped memory for tpu_custom_call.1']
    #allocation10 [shape = 'u8[32768]{0}', space=vmem, size = 0x8000, scoped, tag = 'input window, operand 4, single buffered']
    #allocation11 [shape = 'u8[4096]{0}', space=vmem, size = 0x1000, scoped, tag = 'input window, operand 5, single buffered']
    #allocation12 [shape = 's32[1]{0}', space=sflag, size = 0x4, scoped, tag = 'scoped memory for tpu_custom_call.1']
    #allocation13 [shape = 'u8[4096]{0}', space=vmem, size = 0x1000, scoped, tag = 'output window, operand 0, single buffered']
    %11 = vsyncpa [#allocation3], 0
    %12 = vsyncpa [#allocation6], 0
    %13 = vsyncpa [#allocation9], 0
    %14 = vsyncpa [#allocation12], 0
    %15 = vsyncpa [#allocation4], 0
    // Predicated region
    $region2: #{tpu_custom_call.1} parent=1 // pred_check
      _
    $region3: #{tpu_custom_call.1} parent=1 // pred_check_branch
      %17 = sbr.rel (0) target = $region5
    $region4: #{tpu_custom_call.1} parent=1 // pred_region
      %19 = vsyncadd [#allocation3], 0
      %s21 = sshll.u32 %s0, 4
      %s22 = int_to_ptr.hbm [resolvable:$true] %s21
      %s23 = sshll.u32 [#allocation2], 4
      %s24 = int_to_ptr.vmem [resolvable:$true] %s23
      %26 = dma.hbm_to_vmem [thread:$0]  %s22, 128, %s24, [#allocation3]
    $region5: #{tpu_custom_call.1} parent=1 // pred_fallthru
      _
    // Predicated region
    $region6: #{tpu_custom_call.1} parent=1 // pred_check
      _
    $region7: #{tpu_custom_call.1} parent=1 // pred_check_branch
      %28 = sbr.rel (0) target = $region9
    $region8: #{tpu_custom_call.1} parent=1 // pred_region
      %30 = vsyncadd [#allocation6], 0
      %s31 = sshll.u32 %s1, 4
      %s32 = int_to_ptr.hbm [resolvable:$true] %s31
      %s33 = sshll.u32 [#allocation5], 4
      %s34 = int_to_ptr.vmem [resolvable:$true] %s33
      %39 = dma.hbm_to_vmem [thread:$0]  %s32, 896, %s34, [#allocation6], 128, 128, 8
    $region9: #{tpu_custom_call.1} parent=1 // pred_fallthru
      _
    // Predicated region
    $region10: #{tpu_custom_call.1} parent=1 // pred_check
      _
    $region11: #{tpu_custom_call.1} parent=1 // pred_check_branch
      %41 = sbr.rel (0) target = $region13
    $region12: #{tpu_custom_call.1} parent=1 // pred_region
      %43 = vsyncadd [#allocation6], 0
      %s44 = sshll.u32 %s2, 4
      %s45 = int_to_ptr.hbm [resolvable:$true] %s44
      %s46 = sshll.u32 [#allocation7], 4
      %s47 = int_to_ptr.vmem [resolvable:$true] %s46
      %52 = dma.hbm_to_vmem [thread:$0]  %s45, 1024, %s47, [#allocation6], 128, 128, 8
    $region13: #{tpu_custom_call.1} parent=1 // pred_fallthru
      _
    // Predicated region
    $region14: #{tpu_custom_call.1} parent=1 // pred_check
      _
    $region15: #{tpu_custom_call.1} parent=1 // pred_check_branch
      %54 = sbr.rel (0) target = $region17
    $region16: #{tpu_custom_call.1} parent=1 // pred_region
      %56 = vsyncadd [#allocation9], 0
      %s57 = sshll.u32 %s3, 4
      %s58 = int_to_ptr.hbm [resolvable:$true] %s57
      %s59 = sshll.u32 [#allocation8], 4
      %s60 = int_to_ptr.vmem [resolvable:$true] %s59
      %65 = dma.hbm_to_vmem [thread:$0]  %s58, 1024, %s60, [#allocation9], 128, 128, 8
    $region17: #{tpu_custom_call.1} parent=1 // pred_fallthru
      _
    // Predicated region
    $region18: #{tpu_custom_call.1} parent=1 // pred_check
      _
    $region19: #{tpu_custom_call.1} parent=1 // pred_check_branch
      %67 = sbr.rel (0) target = $region21
    $region20: #{tpu_custom_call.1} parent=1 // pred_region
      %69 = vsyncadd [#allocation9], 0
      %s70 = sshll.u32 %s4, 4
      %s71 = int_to_ptr.hbm [resolvable:$true] %s70
      %s72 = sshll.u32 [#allocation10], 4
      %s73 = int_to_ptr.vmem [resolvable:$true] %s72
      %78 = dma.hbm_to_vmem [thread:$0]  %s71, 1024, %s73, [#allocation9], 128, 128, 8
    $region21: #{tpu_custom_call.1} parent=1 // pred_fallthru
      _
    // Predicated region
    $region22: #{tpu_custom_call.1} parent=1 // pred_check
      _
    $region23: #{tpu_custom_call.1} parent=1 // pred_check_branch
      %80 = sbr.rel (0) target = $region25
    $region24: #{tpu_custom_call.1} parent=1 // pred_region
      %82 = vsyncadd [#allocation12], 0
      %s84 = sshll.u32 %s5, 4
      %s85 = int_to_ptr.hbm [resolvable:$true] %s84
      %s86 = sshll.u32 [#allocation11], 4
      %s87 = int_to_ptr.vmem [resolvable:$true] %s86
      %89 = dma.hbm_to_vmem [thread:$0]  %s85, 128, %s87, [#allocation12]
    $region25: #{tpu_custom_call.1} parent=1 // pred_fallthru
      _
    // Predicated region
    $region26: #{tpu_custom_call.1} parent=1 // pred_check
      _
    $region27: #{tpu_custom_call.1} parent=1 // pred_check_branch
      %91 = sbr.rel (0) target = $region29
    $region28: #{tpu_custom_call.1} parent=1 // pred_region
      %93 = dma.done [#allocation3], 128
    $region29: #{tpu_custom_call.1} parent=1 // pred_fallthru
      _
    // Predicated region
    $region30: #{tpu_custom_call.1} parent=1 // pred_check
      _
    $region31: #{tpu_custom_call.1} parent=1 // pred_check_branch
      %95 = sbr.rel (0) target = $region33
    $region32: #{tpu_custom_call.1} parent=1 // pred_region
      %97 = dma.done [#allocation6], 896
    $region33: #{tpu_custom_call.1} parent=1 // pred_fallthru
      _
    // Predicated region
    $region34: #{tpu_custom_call.1} parent=1 // pred_check
      _
    $region35: #{tpu_custom_call.1} parent=1 // pred_check_branch
      %99 = sbr.rel (0) target = $region37
    $region36: #{tpu_custom_call.1} parent=1 // pred_region
      %101 = dma.done [#allocation6], 1024
    $region37: #{tpu_custom_call.1} parent=1 // pred_fallthru
      _
    // Predicated region
    $region38: #{tpu_custom_call.1} parent=1 // pred_check
      _
    $region39: #{tpu_custom_call.1} parent=1 // pred_check_branch
      %103 = sbr.rel (0) target = $region41
    $region40: #{tpu_custom_call.1} parent=1 // pred_region
      %105 = dma.done [#allocation9], 1024
    $region41: #{tpu_custom_call.1} parent=1 // pred_fallthru
      _
    // Predicated region
    $region42: #{tpu_custom_call.1} parent=1 // pred_check
      _
    $region43: #{tpu_custom_call.1} parent=1 // pred_check_branch
      %107 = sbr.rel (0) target = $region45
    $region44: #{tpu_custom_call.1} parent=1 // pred_region
      %109 = dma.done [#allocation9], 1024
    $region45: #{tpu_custom_call.1} parent=1 // pred_fallthru
      _
    // Predicated region
    $region46: #{tpu_custom_call.1} parent=1 // pred_check
      _
    $region47: #{tpu_custom_call.1} parent=1 // pred_check_branch
      %111 = sbr.rel (0) target = $region49
    $region48: #{tpu_custom_call.1} parent=1 // pred_region
      %113 = dma.done [#allocation12], 128
    $region49: #{tpu_custom_call.1} parent=1 // pred_fallthru
      _
    %v114 = vld [vmem:[#allocation2] sm:$0xff]
    %v115 = vld [vmem:[#allocation11] sm:$0xff]
    %v116 = vld [vmem:[#allocation5] sm:$0xff]
    %v117 = vld [vmem:[#allocation5 + $0x8] sm:$0xff]
    %v118 = vld [vmem:[#allocation5 + $0x10] sm:$0xff]
    %v119 = vld [vmem:[#allocation5 + $0x18] sm:$0xff]
    %v120 = vld [vmem:[#allocation5 + $0x20] sm:$0xff]
    %v121 = vld [vmem:[#allocation5 + $0x28] sm:$0xff]
    %v122 = vld [vmem:[#allocation5 + $0x30] sm:$0xff]
    %v123 = vperm.slane %v115, 0
    %vm124 = vcmask 457728
    %v126 = vsel %vm124, %v114, 0
    %128 = vmatpush.msra.mxu0 0.0
    %129 = vmatpush.msra.mxu0 0.0
    %130 = vmatpush.msra.mxu0 0.0
    %131 = vmatpush.msra.mxu0 0.0
    %132 = vmatpush.msra.mxu0 0.0
    %133 = vmatpush.msra.mxu0 0.0
    %134 = vmatpush.msra.mxu0 0.0
    %135 = vmatpush.msra.mxu0 0.0
    %136 = vmatpush.msra.mxu0 0.0
    %137 = vmatpush.msra.mxu0 %v122
    %138 = vmatpush.msra.mxu0 %v121
    %139 = vmatpush.msra.mxu0 %v120
    %140 = vmatpush.msra.mxu0 %v119
    %141 = vmatpush.msra.mxu0 %v118
    %142 = vmatpush.msra.mxu0 %v117
    %143 = vmatpush.msra.mxu0 %v116
    %144 = vmatmul.f32.gmra.mxu0 %v126
    %v145 = vpop.f32.mrf.mxu0
    %v146 = vadd.f32 %v123, %v145
    %147 = vdwg.mxu0
    %v148 = vlaneseq
    %v149 = vand.u32 %v148, 127
    %vm150 = vcmp.lt.s32.totalorder %v149, 32
    %v151 = vsel %vm150, %v146, 0.0
    %vm152 = vcmask 523264
    %v153 = vsel %vm152, %v151, 0.0
    %154 = vadd.xlane.f32.xlu0 %v153
    %v155 = vpop.xlane.xlu0 %154
    %v156 = vmul.f32 %v155, 0.03125
    %v157 = vsel %vm150, 0.0, %v146
    %v158 = vsel %vm152, %v157, 0.0
    %159 = vadd.xlane.f32.xlu0 %v158
    %v160 = vpop.xlane.xlu0 %159
    %v161 = vmul.f32 %v160, 0.03125
    %v162 = vsel %vm150, %v156, %v161
    %v163 = vsub.f32 %v146, %v162
    %v164 = vmul.f32 %v163, %v163
    %v165 = vsel %vm150, %v164, 0.0
    %v166 = vsel %vm152, %v165, 0.0
    %167 = vadd.xlane.f32.xlu0 %v166
    %v168 = vpop.xlane.xlu0 %167
    %v169 = vmul.f32 %v168, 0.03125
    %v170 = vsel %vm150, 0.0, %v164
    %v171 = vsel %vm152, %v170, 0.0
    %172 = vadd.xlane.f32.xlu0 %v171
    %v173 = vpop.xlane.xlu0 %172
    %v174 = vmul.f32 %v173, 0.03125
    %v175 = vsel %vm150, %v169, %v174
    %v176 = vadd.f32 %v175, 1e-05
    %v177 = vrsqrt.pop %v176
    %v178 = vmul.f32 %v177, %v176
    %v179 = vmul.f32 %v178, %v177
    %v180 = vmul.f32 0.5, %v179
    %v181 = vsub.f32 1.5, %v180
    %v182 = vmul.f32 %v177, %v181
    %vm183 = vweird.f32 %v176
    %vm184 = vweird.f32 %v177
    %vm185 = vmor %vm183, %vm184
    %v186 = vsel %vm185, %v177, %v182
    %v187 = vmul.f32 %v163, %v186
    %v188 = vperm.slane %v115, 1
    %v189 = vmul.f32 %v187, %v188
    %v190 = vperm.slane %v115, 2
    %v191 = vadd.f32 %v189, %v190
    %v192 = vtanh.pop %v191
    %v193 = vld [vmem:[#allocation7] sm:$0xff]
    %v194 = vld [vmem:[#allocation7 + $0x8] sm:$0xff]
    %v195 = vld [vmem:[#allocation7 + $0x10] sm:$0xff]
    %v196 = vld [vmem:[#allocation7 + $0x18] sm:$0xff]
    %v197 = vld [vmem:[#allocation7 + $0x20] sm:$0xff]
    %v198 = vld [vmem:[#allocation7 + $0x28] sm:$0xff]
    %v199 = vld [vmem:[#allocation7 + $0x30] sm:$0xff]
    %v200 = vld [vmem:[#allocation7 + $0x38] sm:$0xff]
    %v201 = vperm.slane %v115, 3
    %v203 = vsel %vm152, %v192, 0
    %205 = vmatpush.msra.mxu0 0.0
    %206 = vmatpush.msra.mxu0 0.0
    %207 = vmatpush.msra.mxu0 0.0
    %208 = vmatpush.msra.mxu0 0.0
    %209 = vmatpush.msra.mxu0 0.0
    %210 = vmatpush.msra.mxu0 0.0
    %211 = vmatpush.msra.mxu0 0.0
    %212 = vmatpush.msra.mxu0 0.0
    %213 = vmatpush.msra.mxu0 %v200
    %214 = vmatpush.msra.mxu0 %v199
    %215 = vmatpush.msra.mxu0 %v198
    %216 = vmatpush.msra.mxu0 %v197
    %217 = vmatpush.msra.mxu0 %v196
    %218 = vmatpush.msra.mxu0 %v195
    %219 = vmatpush.msra.mxu0 %v194
    %220 = vmatpush.msra.mxu0 %v193
    %221 = vmatmul.f32.gmra.mxu0 %v203
    %v222 = vpop.f32.mrf.mxu0
    %v223 = vadd.f32 %v201, %v222
    %224 = vdwg.mxu0
    %v225 = vmax.f32 %v223, 0.0
    %v226 = vld [vmem:[#allocation8] sm:$0xff]
    %v227 = vld [vmem:[#allocation8 + $0x8] sm:$0xff]
    %v228 = vld [vmem:[#allocation8 + $0x10] sm:$0xff]
    %v229 = vld [vmem:[#allocation8 + $0x18] sm:$0xff]
    %v230 = vld [vmem:[#allocation8 + $0x20] sm:$0xff]
    %v231 = vld [vmem:[#allocation8 + $0x28] sm:$0xff]
    %v232 = vld [vmem:[#allocation8 + $0x30] sm:$0xff]
    %v233 = vld [vmem:[#allocation8 + $0x38] sm:$0xff]
    %v234 = vperm.slane %v115, 4
    %v236 = vsel %vm152, %v225, 0
    %238 = vmatpush.msra.mxu0 0.0
    %239 = vmatpush.msra.mxu0 0.0
    %240 = vmatpush.msra.mxu0 0.0
    %241 = vmatpush.msra.mxu0 0.0
    %242 = vmatpush.msra.mxu0 0.0
    %243 = vmatpush.msra.mxu0 0.0
    %244 = vmatpush.msra.mxu0 0.0
    %245 = vmatpush.msra.mxu0 0.0
    %246 = vmatpush.msra.mxu0 %v233
    %247 = vmatpush.msra.mxu0 %v232
    %248 = vmatpush.msra.mxu0 %v231
    %249 = vmatpush.msra.mxu0 %v230
    %250 = vmatpush.msra.mxu0 %v229
    %251 = vmatpush.msra.mxu0 %v228
    %252 = vmatpush.msra.mxu0 %v227
    %253 = vmatpush.msra.mxu0 %v226
    %254 = vmatmul.f32.gmra.mxu0 %v236
    %v255 = vpop.f32.mrf.mxu0
    %v256 = vadd.f32 %v234, %v255
    %257 = vdwg.mxu0
    %v258 = vmax.f32 %v256, 0.0
    %v259 = vld [vmem:[#allocation10] sm:$0xff]
    %v260 = vld [vmem:[#allocation10 + $0x8] sm:$0xff]
    %v261 = vld [vmem:[#allocation10 + $0x10] sm:$0xff]
    %v262 = vld [vmem:[#allocation10 + $0x18] sm:$0xff]
    %v263 = vld [vmem:[#allocation10 + $0x20] sm:$0xff]
    %v264 = vld [vmem:[#allocation10 + $0x28] sm:$0xff]
    %v265 = vld [vmem:[#allocation10 + $0x30] sm:$0xff]
    %v266 = vld [vmem:[#allocation10 + $0x38] sm:$0xff]
    %v267 = vperm.slane %v115, 5
    %v269 = vsel %vm152, %v258, 0
    %271 = vmatpush.msra.mxu0 0.0
    %272 = vmatpush.msra.mxu0 0.0
    %273 = vmatpush.msra.mxu0 0.0
    %274 = vmatpush.msra.mxu0 0.0
    %275 = vmatpush.msra.mxu0 0.0
    %276 = vmatpush.msra.mxu0 0.0
    %277 = vmatpush.msra.mxu0 0.0
    %278 = vmatpush.msra.mxu0 0.0
    %279 = vmatpush.msra.mxu0 %v266
    %280 = vmatpush.msra.mxu0 %v265
    %281 = vmatpush.msra.mxu0 %v264
    %282 = vmatpush.msra.mxu0 %v263
    %283 = vmatpush.msra.mxu0 %v262
    %284 = vmatpush.msra.mxu0 %v261
    %285 = vmatpush.msra.mxu0 %v260
    %286 = vmatpush.msra.mxu0 %v259
    %287 = vmatmul.f32.gmra.mxu0 %v269
    %v288 = vpop.f32.mrf.mxu0
    %v289 = vadd.f32 %v267, %v288
    %290 = vdwg.mxu0
    %v291 = vtanh.pop %v289
    %292 = vst [vmem:[#allocation13] sm:$0xff] %v291
    // Predicated region
    $region50: #{tpu_custom_call.1} parent=1 // pred_check
      _
    $region51: #{tpu_custom_call.1} parent=1 // pred_check_branch
      %294 = sbr.rel (0) target = $region53
    $region52: #{tpu_custom_call.1} parent=1 // pred_region
      %296 = vsyncadd [#allocation4], 0
      %s298 = sshll.u32 [#allocation13], 4
      %s299 = int_to_ptr.vmem [resolvable:$true] %s298
      %s300 = sshll.u32 %s6, 4
      %s301 = int_to_ptr.hbm [resolvable:$true] %s300
      %303 = dma.vmem_to_hbm [thread:$0]  %s299, 128, %s301, [#allocation4]
    $region53: #{tpu_custom_call.1} parent=1 // pred_fallthru
      _
    // Predicated region
    $region54: #{tpu_custom_call.1} parent=1 // pred_check
      _
    $region55: #{tpu_custom_call.1} parent=1 // pred_check_branch
      %305 = sbr.rel (0) target = $region57
    $region56: #{tpu_custom_call.1} parent=1 // pred_region
      %307 = dma.done [#allocation4], 128
    $region57: #{tpu_custom_call.1} parent=1 // pred_fallthru
      _
    %308 = vsyncpa [#allocation3], 1
    %309 = vsyncpa [#allocation6], 1
    %310 = vsyncpa [#allocation9], 1
    %311 = vsyncpa [#allocation12], 1
    %312 = vsyncpa [#allocation4], 1

</llo_original>
